<compile_context>
chip_gen: v7x
topology: tpu7x:2x2x1
jax: 0.10.0
libtpu: 0.0.40
codegen_flags: <defaults>
</compile_context>

<pallas_src>
import jax
import jax.numpy as jnp
from jax.experimental import pallas as pl
from jax.experimental.pallas import tpu as pltpu

_GELU_C1 = 0.7978845608028654            # sqrt(2/pi)
_GELU_C2 = 0.044715 * _GELU_C1           # folded cubic coefficient


def _new_gelu(x):
    # NewGELUActivation: 0.5*x*(1+tanh(sqrt(2/pi)*(x+0.044715*x^3)))
    # rewritten as 0.5*x*(1+tanh(x*(c1+c2*x*x))) -> fewer VPU ops; tanh on EUP.
    return 0.5 * x * (1.0 + jnp.tanh(x * (_GELU_C1 + _GELU_C2 * (x * x))))


def _round_up(x, m):
    return ((x + m - 1) // m) * m


def _chunk_contrib(x, wfc, bfc, wproj):
    """f32 contribution of one I-chunk: gelu(x @ wfc + bfc) @ wproj."""
    h = jnp.dot(x, wfc, preferred_element_type=jnp.float32) + bfc
    h = _new_gelu(h)
    return jnp.dot(h.astype(wproj.dtype), wproj, preferred_element_type=jnp.float32)


# ------------------------------ kernels -------------------------------------


def _mlp_kernel_resident(x_ref, wfc_ref, bfc_ref, wproj_ref, bproj_ref, o_ref):
    # Single pass over I: weight blocks are grid-invariant -> VMEM-resident.
    y = _chunk_contrib(x_ref[...], wfc_ref[...], bfc_ref[...], wproj_ref[...])
    # dropout: eval-mode identity
    # TODO(synk): training-mode dropout (resid_pdrop) not implemented; eval semantics only.
    o_ref[...] = (y + bproj_ref[...]).astype(o_ref.dtype)


def _mlp_kernel_stream_f32(x_ref, wfc_ref, bfc_ref, wproj_ref, bproj_ref, o_ref):
    # I streamed in chunks, f32 output: accumulate directly into the resident
    # output block (no scratch, no final copy).
    k = pl.program_id(1)

    @pl.when(k == 0)
    def _():
        o_ref[...] = jnp.zeros_like(o_ref)

    o_ref[...] += _chunk_contrib(x_ref[...], wfc_ref[...], bfc_ref[...],
                                 wproj_ref[...])

    @pl.when(k == pl.num_programs(1) - 1)
    def _():
        o_ref[...] += bproj_ref[...]


def _mlp_kernel_stream_acc(x_ref, wfc_ref, bfc_ref, wproj_ref, bproj_ref, o_ref,
                           acc_ref):
    # I streamed in chunks, non-f32 output: accumulate in an f32 VMEM scratch.
    k = pl.program_id(1)

    @pl.when(k == 0)
    def _():
        acc_ref[...] = jnp.zeros_like(acc_ref)

    acc_ref[...] += _chunk_contrib(x_ref[...], wfc_ref[...], bfc_ref[...],
                                   wproj_ref[...])

    @pl.when(k == pl.num_programs(1) - 1)
    def _():
        o_ref[...] = (acc_ref[...] + bproj_ref[...]).astype(o_ref.dtype)


# --------------------------- tiling heuristics -------------------------------


def _vmem_capacity_bytes():
    try:
        cap = int(pltpu.get_tpu_info().vmem_capacity_bytes)
        if cap > 0:
            return cap
    except Exception:
        pass
    return 64 << 20   # conservative default (v7x per-TensorCore VMEM)


def _footprint_bytes(tm, ti, D, in_b, out_b, use_acc):
    nbuf = 2                                    # Pallas double-buffers pipelined operands
    total = nbuf * tm * D * in_b                # x tile
    total += nbuf * (D * ti + ti * D) * in_b    # W_fc / W_proj chunks
    total += nbuf * (ti + D) * 4                # f32 biases
    total += nbuf * tm * D * out_b              # output tile
    if use_acc:
        total += tm * D * 4                     # f32 accumulator scratch
    return total


def _ti_candidates(Ip, cap):
    """128-aligned proper divisors of Ip, descending."""
    out = []
    start = min(cap, Ip - 128)
    start -= start % 128
    for c in range(start, 127, -128):
        if Ip % c == 0:
            out.append(c)
    return out


def _choose_tiles(M, D, Ip, in_b, out_b, out_is_f32, budget):
    m16 = _round_up(M, 16)
    tm_cands = []
    for t in (1024, 512, 256, 128, 64, 32, 16):
        te = min(t, m16)
        if te not in tm_cands:
            tm_cands.append(te)

    # 1) Full-I single pass: weights grid-invariant / VMEM-resident (weights are
    #    read from HBM exactly once). Prefer the largest row tile that fits.
    for tm in tm_cands:
        if _footprint_bytes(tm, Ip, D, in_b, out_b, use_acc=False) <= budget:
            return tm, Ip

    # 2) Stream I in chunks. The row tile is the main HBM-traffic lever (weights
    #    are re-read once per row tile), so maximize tm first, then the chunk.
    use_acc = not out_is_f32
    for tm in tm_cands:
        for ti in _ti_candidates(Ip, cap=2048):
            if _footprint_bytes(tm, ti, D, in_b, out_b, use_acc) <= budget:
                return tm, ti

    # 3) Last resort (tiny budget): smallest row tile, smallest chunk.
    return tm_cands[-1], 128


# ------------------------------ wrapper --------------------------------------


def gpt2_mlp(hidden_states, w_fc, b_fc, w_proj, b_proj, *,
             compute_dtype=jnp.bfloat16, tm=None, ti=None,
             vmem_budget_frac=0.7):
    """GPT2MLP forward: dropout(c_proj(new_gelu(c_fc(x)))) with eval-mode dropout.

    hidden_states: [B, S, D]; w_fc: [D, I]; b_fc: [I]; w_proj: [I, D]; b_proj: [D]
    (Conv1D orientation kept: y = x @ W + b). Matmuls run with `compute_dtype`
    operands and f32 accumulation. Pass bf16 params to avoid wrapper-side casts.
    """
    B, S, D = hidden_states.shape
    I = w_fc.shape[1]
    M = B * S
    in_b = jnp.dtype(compute_dtype).itemsize
    out_dtype = hidden_states.dtype
    out_b = jnp.dtype(out_dtype).itemsize
    out_is_f32 = out_dtype == jnp.float32

    # Pad the intermediate dim to a multiple of 128 so every chunk satisfies the
    # (8,128) block constraint (padded cols/rows contribute exactly zero).
    Ip = _round_up(I, 128)

    def _cast(a, dt):
        return a if a.dtype == dt else a.astype(dt)

    wfc = _cast(w_fc, compute_dtype)
    wproj = _cast(w_proj, compute_dtype)
    bfc2 = _cast(b_fc, jnp.float32).reshape(1, I)
    bproj2 = _cast(b_proj, jnp.float32).reshape(1, D)
    if Ip != I:
        wfc = jnp.pad(wfc, ((0, 0), (0, Ip - I)))
        wproj = jnp.pad(wproj, ((0, Ip - I), (0, 0)))
        bfc2 = jnp.pad(bfc2, ((0, 0), (0, Ip - I)))

    # Tile selection against this generation's VMEM (v5e/v6e 128 MiB, v7x 64 MiB).
    capacity = _vmem_capacity_bytes()
    budget = int(vmem_budget_frac * capacity)
    tm_auto, ti_auto = _choose_tiles(M, D, Ip, in_b, out_b, out_is_f32, budget)
    tm_eff = tm_auto if tm is None else min(tm, _round_up(M, 16))
    ti_eff = ti_auto if ti is None else ti
    n_k = Ip // ti_eff

    Mp = _round_up(M, tm_eff)
    n_row = Mp // tm_eff

    x2d = _cast(hidden_states.reshape(M, D), compute_dtype)
    if Mp != M:
        x2d = jnp.pad(x2d, ((0, Mp - M), (0, 0)))

    use_acc = (n_k > 1) and (not out_is_f32)
    vmem_limit = int(min(
        0.9 * capacity,
        max(32 << 20,
            _footprint_bytes(tm_eff, ti_eff, D, in_b, out_b, use_acc) + (8 << 20))))

    if n_k == 1:
        grid = (n_row,)
        in_specs = [
            pl.BlockSpec((tm_eff, D), lambda i: (i, 0)),     # x rows
            pl.BlockSpec((D, Ip), lambda i: (0, 0)),         # W_fc (VMEM-resident)
            pl.BlockSpec((1, Ip), lambda i: (0, 0)),         # b_fc
            pl.BlockSpec((Ip, D), lambda i: (0, 0)),         # W_proj (VMEM-resident)
            pl.BlockSpec((1, D), lambda i: (0, 0)),          # b_proj
        ]
        out_spec = pl.BlockSpec((tm_eff, D), lambda i: (i, 0))
        scratch = []
        kernel = _mlp_kernel_resident
        dims = ("parallel",)
    else:
        grid = (n_row, n_k)                                  # I (reduction) innermost
        in_specs = [
            pl.BlockSpec((tm_eff, D), lambda i, k: (i, 0)),  # x rows (held across k)
            pl.BlockSpec((D, ti_eff), lambda i, k: (0, k)),  # W_fc I-chunk
            pl.BlockSpec((1, ti_eff), lambda i, k: (0, k)),  # b_fc I-chunk
            pl.BlockSpec((ti_eff, D), lambda i, k: (k, 0)),  # W_proj I-chunk
            pl.BlockSpec((1, D), lambda i, k: (0, 0)),       # b_proj
        ]
        out_spec = pl.BlockSpec((tm_eff, D), lambda i, k: (i, 0))  # resident over k
        dims = ("parallel", "arbitrary")
        if out_is_f32:
            scratch = []
            kernel = _mlp_kernel_stream_f32
        else:
            scratch = [pltpu.VMEM((tm_eff, D), jnp.float32)]
            kernel = _mlp_kernel_stream_acc

    weight_bytes = (wfc.size + wproj.size) * in_b
    weight_reads = 1 if n_k == 1 else n_row
    cost = pl.CostEstimate(
        flops=4 * Mp * D * Ip,
        transcendentals=Mp * Ip,
        bytes_accessed=int(x2d.size * in_b + weight_reads * weight_bytes
                           + Mp * D * out_b),
    )

    out2d = pl.pallas_call(
        kernel,
        out_shape=jax.ShapeDtypeStruct((Mp, D), out_dtype),
        grid_spec=pltpu.PrefetchScalarGridSpec(
            num_scalar_prefetch=0,
            grid=grid,
            in_specs=in_specs,
            out_specs=out_spec,
            scratch_shapes=scratch,
        ),
        compiler_params=pltpu.CompilerParams(
            dimension_semantics=dims,
            vmem_limit_bytes=vmem_limit,
        ),
        cost_estimate=cost,
    )(x2d, wfc, bfc2, wproj, bproj2)

    if Mp != M:
        out2d = out2d[:M]
    return out2d.reshape(B, S, D)


def gpt2_mlp_ref(hidden_states, w_fc, b_fc, w_proj, b_proj,
                 compute_dtype=jnp.bfloat16):
    """Pure-JAX reference with the same bf16-operand / f32-accumulate numerics."""
    xb = hidden_states.astype(compute_dtype)
    h = jnp.dot(xb, w_fc.astype(compute_dtype),
                preferred_element_type=jnp.float32) + b_fc.astype(jnp.float32)
    h = _new_gelu(h)
    y = jnp.dot(h.astype(compute_dtype), w_proj.astype(compute_dtype),
                preferred_element_type=jnp.float32) + b_proj.astype(jnp.float32)
    return y.astype(hidden_states.dtype)


if __name__ == "__main__":
    # Small but lane-aligned GPT2MLP config: hidden_size=128, intermediate=4*128.
    B, S, D = 2, 8, 128
    I = 4 * D

    key = jax.random.PRNGKey(0)
    k_x, k_wfc, k_wproj = jax.random.split(key, 3)

    x = jax.random.normal(k_x, (B, S, D), dtype=jnp.float32)
    # Conv1D init: weight ~ N(0, 0.02), bias = 0 (weights stored as [nx, nf]).
    w_fc = 0.02 * jax.random.normal(k_wfc, (D, I), dtype=jnp.float32)
    b_fc = jnp.zeros((I,), dtype=jnp.float32)
    w_proj = 0.02 * jax.random.normal(k_wproj, (I, D), dtype=jnp.float32)
    b_proj = jnp.zeros((D,), dtype=jnp.float32)

    ref = gpt2_mlp_ref(x, w_fc, b_fc, w_proj, b_proj)

    # 1) auto config: single pass over I, weights VMEM-resident.
    out = jax.block_until_ready(gpt2_mlp(x, w_fc, b_fc, w_proj, b_proj))
    assert out.shape == (B, S, D)
    assert jnp.allclose(out, ref, atol=5e-3, rtol=5e-2), "auto config mismatch"

    # 2) forced I-streaming, f32 output (accumulate directly into output block).
    out_s = jax.block_until_ready(gpt2_mlp(x, w_fc, b_fc, w_proj, b_proj, ti=128))
    assert jnp.allclose(out_s, ref, atol=5e-3, rtol=5e-2), "streamed f32 mismatch"

    # 3) forced I-streaming, bf16 output (f32 scratch accumulator path).
    x_bf = x.astype(jnp.bfloat16)
    ref_bf = gpt2_mlp_ref(x_bf, w_fc, b_fc, w_proj, b_proj).astype(jnp.float32)
    out_bf = jax.block_until_ready(
        gpt2_mlp(x_bf, w_fc, b_fc, w_proj, b_proj, ti=128)).astype(jnp.float32)
    assert jnp.allclose(out_bf, ref_bf, atol=1e-2, rtol=5e-2), "streamed bf16 mismatch"

    print("KERNEL_OK")
</pallas_src>

<mosaic_0001>
module attributes {stable_mosaic.version = 11 : i64} {
  func.func @_mlp_kernel_resident(%arg0: i32, %arg1: memref<16x128xbf16, #tpu.memory_space<vmem>>, %arg2: memref<128x512xbf16, #tpu.memory_space<vmem>>, %arg3: memref<1x512xf32, #tpu.memory_space<vmem>>, %arg4: memref<512x128xbf16, #tpu.memory_space<vmem>>, %arg5: memref<1x128xf32, #tpu.memory_space<vmem>>, %arg6: memref<16x128xf32, #tpu.memory_space<vmem>>) attributes {dimension_semantics = [#tpu.dimension_semantics<parallel>], iteration_bounds = array<i64: 1>, scalar_prefetch = 0 : i64, scratch_operands = 0 : i64, tpu.core_type = #tpu.core_type<tc>, window_params = [{transform_indices = @transform_0, window_bounds = array<i64: 16, 128>}, {pipeline_mode = #tpu.pipeline_mode<synchronous>, transform_indices = @transform_1, window_bounds = array<i64: 128, 512>}, {pipeline_mode = #tpu.pipeline_mode<synchronous>, transform_indices = @transform_2, window_bounds = array<i64: 1, 512>}, {pipeline_mode = #tpu.pipeline_mode<synchronous>, transform_indices = @transform_3, window_bounds = array<i64: 512, 128>}, {pipeline_mode = #tpu.pipeline_mode<synchronous>, transform_indices = @transform_4, window_bounds = array<i64: 1, 128>}, {transform_indices = @transform_5, window_bounds = array<i64: 16, 128>}]} {
    %c0 = arith.constant 0 : index
    %c0_0 = arith.constant 0 : index
    %0 = vector.load %arg1[%c0, %c0_0] : memref<16x128xbf16, #tpu.memory_space<vmem>>, vector<16x128xbf16>
    %c0_1 = arith.constant 0 : index
    %c0_2 = arith.constant 0 : index
    %1 = vector.load %arg2[%c0_1, %c0_2] : memref<128x512xbf16, #tpu.memory_space<vmem>>, vector<128x512xbf16>
    %c0_3 = arith.constant 0 : index
    %c0_4 = arith.constant 0 : index
    %2 = vector.load %arg3[%c0_3, %c0_4] : memref<1x512xf32, #tpu.memory_space<vmem>>, vector<1x512xf32>
    %c0_5 = arith.constant 0 : index
    %c0_6 = arith.constant 0 : index
    %3 = vector.load %arg4[%c0_5, %c0_6] : memref<512x128xbf16, #tpu.memory_space<vmem>>, vector<512x128xbf16>
    %cst = arith.constant dense<0.000000e+00> : vector<16x512xf32>
    %4 = tpu.matmul %0, %1, %cst {dimension_numbers = #tpu.dot_dimension_numbers<[1], [0], [0], [1], [0, 0, 1, 1], [], []>} : vector<16x128xbf16>, vector<128x512xbf16>, vector<16x512xf32> -> vector<16x512xf32>
    %5 = vector.broadcast %2 : vector<1x512xf32> to vector<16x512xf32>
    %6 = arith.addf %4, %5 : vector<16x512xf32>
    %cst_7 = arith.constant 5.000000e-01 : f32
    %7 = vector.broadcast %cst_7 : f32 to vector<16x512xf32>
    %8 = arith.mulf %7, %6 : vector<16x512xf32>
    %9 = arith.mulf %6, %6 : vector<16x512xf32>
    %cst_8 = arith.constant 0.0356774069 : f32
    %10 = vector.broadcast %cst_8 : f32 to vector<16x512xf32>
    %11 = arith.mulf %10, %9 : vector<16x512xf32>
    %cst_9 = arith.constant 0.797884583 : f32
    %12 = vector.broadcast %cst_9 : f32 to vector<16x512xf32>
    %13 = arith.addf %12, %11 : vector<16x512xf32>
    %14 = arith.mulf %6, %13 : vector<16x512xf32>
    %15 = math.tanh %14 : vector<16x512xf32>
    %cst_10 = arith.constant 1.000000e+00 : f32
    %16 = vector.broadcast %cst_10 : f32 to vector<16x512xf32>
    %17 = arith.addf %16, %15 : vector<16x512xf32>
    %18 = arith.mulf %8, %17 : vector<16x512xf32>
    %19 = arith.truncf %18 : vector<16x512xf32> to vector<16x512xbf16>
    %cst_11 = arith.constant dense<0.000000e+00> : vector<16x128xf32>
    %20 = tpu.matmul %19, %3, %cst_11 {dimension_numbers = #tpu.dot_dimension_numbers<[1], [0], [0], [1], [0, 0, 1, 1], [], []>} : vector<16x512xbf16>, vector<512x128xbf16>, vector<16x128xf32> -> vector<16x128xf32>
    %c0_12 = arith.constant 0 : index
    %c0_13 = arith.constant 0 : index
    %21 = vector.load %arg5[%c0_12, %c0_13] : memref<1x128xf32, #tpu.memory_space<vmem>>, vector<1x128xf32>
    %22 = vector.broadcast %21 : vector<1x128xf32> to vector<16x128xf32>
    %23 = arith.addf %20, %22 : vector<16x128xf32>
    %c0_14 = arith.constant 0 : index
    %c0_15 = arith.constant 0 : index
    %24 = vector.load %arg6[%c0_14, %c0_15] : memref<16x128xf32, #tpu.memory_space<vmem>>, vector<16x128xf32>
    tpu.vector_store %arg6[%c0_14, %c0_15], %23 {strides = array<i32>} : memref<16x128xf32, #tpu.memory_space<vmem>>, vector<16x128xf32>,
    return
  }
  func.func @transform_0(%arg0: i32) -> (i32, i32) {
    %c0_i32 = arith.constant 0 : i32
    %c0_i32_0 = arith.constant 0 : i32
    return %arg0, %c0_i32 : i32, i32
  }
  func.func @transform_1(%arg0: i32) -> (i32, i32) {
    %c0_i32 = arith.constant 0 : i32
    %c0_i32_0 = arith.constant 0 : i32
    %c0_i32_1 = arith.constant 0 : i32
    return %c0_i32, %c0_i32_0 : i32, i32
  }
  func.func @transform_2(%arg0: i32) -> (i32, i32) {
    %c0_i32 = arith.constant 0 : i32
    %c0_i32_0 = arith.constant 0 : i32
    %c0_i32_1 = arith.constant 0 : i32
    return %c0_i32, %c0_i32_0 : i32, i32
  }
  func.func @transform_3(%arg0: i32) -> (i32, i32) {
    %c0_i32 = arith.constant 0 : i32
    %c0_i32_0 = arith.constant 0 : i32
    %c0_i32_1 = arith.constant 0 : i32
    return %c0_i32, %c0_i32_0 : i32, i32
  }
  func.func @transform_4(%arg0: i32) -> (i32, i32) {
    %c0_i32 = arith.constant 0 : i32
    %c0_i32_0 = arith.constant 0 : i32
    %c0_i32_1 = arith.constant 0 : i32
    return %c0_i32, %c0_i32_0 : i32, i32
  }
  func.func @transform_5(%arg0: i32) -> (i32, i32) {
    %c0_i32 = arith.constant 0 : i32
    %c0_i32_0 = arith.constant 0 : i32
    return %arg0, %c0_i32 : i32, i32
  }
}

</mosaic_0001>

<llo_original>
// kernel: tpu_custom_call.1
$region0: #{tpu_custom_call.1}
  #allocation0 [shape = 'u32[]', space=smem, size = 0x4, offset = 0x4, fixed_abs, tag = 'smem constant byte address 0x4 - core index']
  #allocation1 [shape = 'u32[144,128]{1,0:T(1,128)}', space=vmem, size = 0x12000, scoped, tag = 'internal scratch']
  %s0 = inlined_call_operand.hbm [shape: bf16[16,128], index: 0, kind: input, shape index: {}]
  %s1 = inlined_call_operand.hbm [shape: bf16[128,512], index: 1, kind: input, shape index: {}]
  %s2 = inlined_call_operand.vmem [shape: f32[1,512], index: 2, kind: input, shape index: {}]
  %s3 = inlined_call_operand.hbm [shape: bf16[512,128], index: 3, kind: input, shape index: {}]
  %s4 = inlined_call_operand.vmem [shape: f32[1,128], index: 4, kind: input, shape index: {}]
  %s5 = inlined_call_operand.hbm [shape: f32[16,128], index: 5, kind: output, shape index: {}]
  %s6 = sld [smem:[#allocation0]]
  $region42: #{tpu_custom_call.1} parent=0
    _
  %s8 = ssub.s32 1, %s6
  %s9 = scalar_select 0, %s8, %s6
  $region1: #{tpu_custom_call.1} parent=0
    #allocation2 [shape = 'u8[4096]{0}', space=vmem, size = 0x1000, scoped, tag = 'input window, operand 0, single buffered']
    #allocation3 [shape = 's32[1]{0}', space=sflag, size = 0x4, scoped, tag = 'scoped memory for tpu_custom_call.1']
    #allocation4 [shape = 's32[1]{0}', space=sflag, size = 0x4, scoped, tag = 'scoped memory for tpu_custom_call.1']
    #allocation5 [shape = 'u8[131072]{0}', space=vmem, size = 0x20000, scoped, tag = 'input window, operand 1, single buffered']
    #allocation6 [shape = 's32[1]{0}', space=sflag, size = 0x4, scoped, tag = 'scoped memory for tpu_custom_call.1']
    #allocation7 [shape = 'u8[131072]{0}', space=vmem, size = 0x20000, scoped, tag = 'input window, operand 3, single buffered']
    #allocation8 [shape = 'u8[8192]{0}', space=vmem, size = 0x2000, scoped, tag = 'output window, operand 0, single buffered']
    %10 = vsyncpa [#allocation3], 0
    %11 = vsyncpa [#allocation6], 0
    %12 = vsyncpa [#allocation4], 0
    // Predicated region
    $region2: #{tpu_custom_call.1} parent=1 // pred_check
      _
    $region3: #{tpu_custom_call.1} parent=1 // pred_check_branch
      %14 = sbr.rel (0) target = $region5
    $region4: #{tpu_custom_call.1} parent=1 // pred_region
      %s16 = ssub.s32 128, 128
      %17 = vsyncadd [#allocation3], %s16
      %s18 = sshll.u32 [#allocation2], 4
      %s19 = int_to_ptr.vmem [resolvable:$true] %s18
      %24 = dma.hbm_to_vmem [thread:$0]  %s0, 128, %s19, [#allocation3], 64, 64, 4
    $region5: #{tpu_custom_call.1} parent=1 // pred_fallthru
      _
    // Predicated region
    $region6: #{tpu_custom_call.1} parent=1 // pred_check
      _
    $region7: #{tpu_custom_call.1} parent=1 // pred_check_branch
      %26 = sbr.rel (0) target = $region9
    $region8: #{tpu_custom_call.1} parent=1 // pred_region
      %s28 = ssub.s32 4096, 4096
      %29 = vsyncadd [#allocation6], %s28
      %s30 = sshll.u32 [#allocation5], 4
      %s31 = int_to_ptr.vmem [resolvable:$true] %s30
      %36 = dma.hbm_to_vmem [thread:$0]  %s1, 4096, %s31, [#allocation6], 256, 256, 16
    $region9: #{tpu_custom_call.1} parent=1 // pred_fallthru
      _
    // Predicated region
    $region10: #{tpu_custom_call.1} parent=1 // pred_check
      _
    $region11: #{tpu_custom_call.1} parent=1 // pred_check_branch
      %38 = sbr.rel (0) target = $region13
    $region12: #{tpu_custom_call.1} parent=1 // pred_region
      _
    $region13: #{tpu_custom_call.1} parent=1 // pred_fallthru
      _
    // Predicated region
    $region14: #{tpu_custom_call.1} parent=1 // pred_check
      _
    $region15: #{tpu_custom_call.1} parent=1 // pred_check_branch
      %40 = sbr.rel (0) target = $region17
    $region16: #{tpu_custom_call.1} parent=1 // pred_region
      %s42 = ssub.s32 4096, 4096
      %43 = vsyncadd [#allocation6], %s42
      %s44 = sshll.u32 [#allocation7], 4
      %s45 = int_to_ptr.vmem [resolvable:$true] %s44
      %50 = dma.hbm_to_vmem [thread:$0]  %s3, 4096, %s45, [#allocation6], 64, 64, 4
    $region17: #{tpu_custom_call.1} parent=1 // pred_fallthru
      _
    // Predicated region
    $region18: #{tpu_custom_call.1} parent=1 // pred_check
      _
    $region19: #{tpu_custom_call.1} parent=1 // pred_check_branch
      %52 = sbr.rel (0) target = $region21
    $region20: #{tpu_custom_call.1} parent=1 // pred_region
      _
    $region21: #{tpu_custom_call.1} parent=1 // pred_fallthru
      _
    // Predicated region
    $region22: #{tpu_custom_call.1} parent=1 // pred_check
      _
    $region23: #{tpu_custom_call.1} parent=1 // pred_check_branch
      %54 = sbr.rel (0) target = $region25
    $region24: #{tpu_custom_call.1} parent=1 // pred_region
      %55 = dma.done [#allocation3], 128
    $region25: #{tpu_custom_call.1} parent=1 // pred_fallthru
      _
    // Predicated region
    $region26: #{tpu_custom_call.1} parent=1 // pred_check
      _
    $region27: #{tpu_custom_call.1} parent=1 // pred_check_branch
      %57 = sbr.rel (0) target = $region29
    $region28: #{tpu_custom_call.1} parent=1 // pred_region
      %58 = dma.done [#allocation6], 4096
    $region29: #{tpu_custom_call.1} parent=1 // pred_fallthru
      _
    // Predicated region
    $region30: #{tpu_custom_call.1} parent=1 // pred_check
      _
    $region31: #{tpu_custom_call.1} parent=1 // pred_check_branch
      %60 = sbr.rel (0) target = $region33
    $region32: #{tpu_custom_call.1} parent=1 // pred_region
      %61 = dma.done [#allocation6], 4096
    $region33: #{tpu_custom_call.1} parent=1 // pred_fallthru
      _
    %v63 = vld [vmem:[#allocation2] sm:$0xf]
    %v64 = vld [vmem:[#allocation2 + $0x4] sm:$0xf]
    %v65 = vld [vmem:[#allocation5] sm:$0xff]
    %v66 = vld [vmem:[#allocation5 + $0x8] sm:$0xff]
    %v67 = vld [vmem:[#allocation5 + $0x10] sm:$0xff]
    %v68 = vld [vmem:[#allocation5 + $0x18] sm:$0xff]
    %v69 = vld [vmem:[#allocation5 + $0x20] sm:$0xff]
    %v70 = vld [vmem:[#allocation5 + $0x28] sm:$0xff]
    %v71 = vld [vmem:[#allocation5 + $0x30] sm:$0xff]
    %v72 = vld [vmem:[#allocation5 + $0x38] sm:$0xff]
    %v73 = vld [vmem:[#allocation5 + $0x40] sm:$0xff]
    %v74 = vld [vmem:[#allocation5 + $0x48] sm:$0xff]
    %v75 = vld [vmem:[#allocation5 + $0x50] sm:$0xff]
    %v76 = vld [vmem:[#allocation5 + $0x58] sm:$0xff]
    %v77 = vld [vmem:[#allocation5 + $0x60] sm:$0xff]
    %v78 = vld [vmem:[#allocation5 + $0x68] sm:$0xff]
    %v79 = vld [vmem:[#allocation5 + $0x70] sm:$0xff]
    %v80 = vld [vmem:[#allocation5 + $0x78] sm:$0xff]
    %v81 = vld [vmem:[#allocation5 + $0x80] sm:$0xff]
    %v82 = vld [vmem:[#allocation5 + $0x88] sm:$0xff]
    %v83 = vld [vmem:[#allocation5 + $0x90] sm:$0xff]
    %v84 = vld [vmem:[#allocation5 + $0x98] sm:$0xff]
    %v85 = vld [vmem:[#allocation5 + $0xa0] sm:$0xff]
    %v86 = vld [vmem:[#allocation5 + $0xa8] sm:$0xff]
    %v87 = vld [vmem:[#allocation5 + $0xb0] sm:$0xff]
    %v88 = vld [vmem:[#allocation5 + $0xb8] sm:$0xff]
    %v89 = vld [vmem:[#allocation5 + $0xc0] sm:$0xff]
    %v90 = vld [vmem:[#allocation5 + $0xc8] sm:$0xff]
    %v91 = vld [vmem:[#allocation5 + $0xd0] sm:$0xff]
    %v92 = vld [vmem:[#allocation5 + $0xd8] sm:$0xff]
    %v93 = vld [vmem:[#allocation5 + $0xe0] sm:$0xff]
    %v94 = vld [vmem:[#allocation5 + $0xe8] sm:$0xff]
    %v95 = vld [vmem:[#allocation5 + $0xf0] sm:$0xff]
    %v96 = vld [vmem:[#allocation5 + $0xf8] sm:$0xff]
    %v97 = vld [vmem:[%s2] sm:$0xf]
    %v98 = vld [vmem:[#allocation7] sm:$0xf]
    %v99 = vld [vmem:[#allocation7 + $0x4] sm:$0xf]
    %v100 = vld [vmem:[#allocation7 + $0x8] sm:$0xf]
    %v101 = vld [vmem:[#allocation7 + $0xc] sm:$0xf]
    %v102 = vld [vmem:[#allocation7 + $0x10] sm:$0xf]
    %v103 = vld [vmem:[#allocation7 + $0x14] sm:$0xf]
    %v104 = vld [vmem:[#allocation7 + $0x18] sm:$0xf]
    %v105 = vld [vmem:[#allocation7 + $0x1c] sm:$0xf]
    %v106 = vld [vmem:[#allocation7 + $0x20] sm:$0xf]
    %v107 = vld [vmem:[#allocation7 + $0x24] sm:$0xf]
    %v108 = vld [vmem:[#allocation7 + $0x28] sm:$0xf]
    %v109 = vld [vmem:[#allocation7 + $0x2c] sm:$0xf]
    %v110 = vld [vmem:[#allocation7 + $0x30] sm:$0xf]
    %v111 = vld [vmem:[#allocation7 + $0x34] sm:$0xf]
    %v112 = vld [vmem:[#allocation7 + $0x38] sm:$0xf]
    %v113 = vld [vmem:[#allocation7 + $0x3c] sm:$0xf]
    %v114 = vld [vmem:[#allocation7 + $0x40] sm:$0xf]
    %v115 = vld [vmem:[#allocation7 + $0x44] sm:$0xf]
    %v116 = vld [vmem:[#allocation7 + $0x48] sm:$0xf]
    %v117 = vld [vmem:[#allocation7 + $0x4c] sm:$0xf]
    %v118 = vld [vmem:[#allocation7 + $0x50] sm:$0xf]
    %v119 = vld [vmem:[#allocation7 + $0x54] sm:$0xf]
    %v120 = vld [vmem:[#allocation7 + $0x58] sm:$0xf]
    %v121 = vld [vmem:[#allocation7 + $0x5c] sm:$0xf]
    %v122 = vld [vmem:[#allocation7 + $0x60] sm:$0xf]
    %v123 = vld [vmem:[#allocation7 + $0x64] sm:$0xf]
    %v124 = vld [vmem:[#allocation7 + $0x68] sm:$0xf]
    %v125 = vld [vmem:[#allocation7 + $0x6c] sm:$0xf]
    %v126 = vld [vmem:[#allocation7 + $0x70] sm:$0xf]
    %v127 = vld [vmem:[#allocation7 + $0x74] sm:$0xf]
    %v128 = vld [vmem:[#allocation7 + $0x78] sm:$0xf]
    %v129 = vld [vmem:[#allocation7 + $0x7c] sm:$0xf]
    %v130 = vld [vmem:[#allocation7 + $0x80] sm:$0xf]
    %v131 = vld [vmem:[#allocation7 + $0x84] sm:$0xf]
    %v132 = vld [vmem:[#allocation7 + $0x88] sm:$0xf]
    %v133 = vld [vmem:[#allocation7 + $0x8c] sm:$0xf]
    %v134 = vld [vmem:[#allocation7 + $0x90] sm:$0xf]
    %v135 = vld [vmem:[#allocation7 + $0x94] sm:$0xf]
    %v136 = vld [vmem:[#allocation7 + $0x98] sm:$0xf]
    %v137 = vld [vmem:[#allocation7 + $0x9c] sm:$0xf]
    %v138 = vld [vmem:[#allocation7 + $0xa0] sm:$0xf]
    %v139 = vld [vmem:[#allocation7 + $0xa4] sm:$0xf]
    %v140 = vld [vmem:[#allocation7 + $0xa8] sm:$0xf]
    %v141 = vld [vmem:[#allocation7 + $0xac] sm:$0xf]
    %v142 = vld [vmem:[#allocation7 + $0xb0] sm:$0xf]
    %v143 = vld [vmem:[#allocation7 + $0xb4] sm:$0xf]
    %v144 = vld [vmem:[#allocation7 + $0xb8] sm:$0xf]
    %v145 = vld [vmem:[#allocation7 + $0xbc] sm:$0xf]
    %v146 = vld [vmem:[#allocation7 + $0xc0] sm:$0xf]
    %v147 = vld [vmem:[#allocation7 + $0xc4] sm:$0xf]
    %v148 = vld [vmem:[#allocation7 + $0xc8] sm:$0xf]
    %v149 = vld [vmem:[#allocation7 + $0xcc] sm:$0xf]
    %v150 = vld [vmem:[#allocation7 + $0xd0] sm:$0xf]
    %v151 = vld [vmem:[#allocation7 + $0xd4] sm:$0xf]
    %v152 = vld [vmem:[#allocation7 + $0xd8] sm:$0xf]
    %v153 = vld [vmem:[#allocation7 + $0xdc] sm:$0xf]
    %v154 = vld [vmem:[#allocation7 + $0xe0] sm:$0xf]
    %v155 = vld [vmem:[#allocation7 + $0xe4] sm:$0xf]
    %v156 = vld [vmem:[#allocation7 + $0xe8] sm:$0xf]
    %v157 = vld [vmem:[#allocation7 + $0xec] sm:$0xf]
    %v158 = vld [vmem:[#allocation7 + $0xf0] sm:$0xf]
    %v159 = vld [vmem:[#allocation7 + $0xf4] sm:$0xf]
    %v160 = vld [vmem:[#allocation7 + $0xf8] sm:$0xf]
    %v161 = vld [vmem:[#allocation7 + $0xfc] sm:$0xf]
    %v163 = vlaneseq
    %v164 = vshrl.u32 %v163, 7
    %v165 = vsub.s32 0, %v164
    %v166 = vrot.slane %v97, %v165
    %v167 = vlaneseq
    %v168 = vshrl.u32 %v167, 7
    %v169 = vsub.s32 1, %v168
    %v170 = vrot.slane %v97, %v169
    %v171 = vlaneseq
    %v172 = vshrl.u32 %v171, 7
    %v173 = vsub.s32 2, %v172
    %v174 = vrot.slane %v97, %v173
    %v175 = vlaneseq
    %v176 = vshrl.u32 %v175, 7
    %v177 = vsub.s32 3, %v176
    %v178 = vrot.slane %v97, %v177
    %v185 = vunpack.c.l.b16 %v63
    %v186 = vunpack.c.l.b16 %v64
    %v187 = vpack.c.b16 %v186, %v185
    %v221 = vunpack.c.l.b16 %v65
    %v222 = vunpack.c.h.b16 %v65
    %v223 = vunpack.c.l.b16 %v66
    %v224 = vunpack.c.h.b16 %v66
    %v225 = vunpack.c.l.b16 %v67
    %v226 = vunpack.c.h.b16 %v67
    %v227 = vunpack.c.l.b16 %v68
    %v228 = vunpack.c.h.b16 %v68
    %v229 = vunpack.c.l.b16 %v69
    %v230 = vunpack.c.h.b16 %v69
    %v231 = vunpack.c.l.b16 %v70
    %v232 = vunpack.c.h.b16 %v70
    %v233 = vunpack.c.l.b16 %v71
    %v234 = vunpack.c.h.b16 %v71
    %v235 = vunpack.c.l.b16 %v72
    %v236 = vunpack.c.h.b16 %v72
    %v237 = vunpack.c.l.b16 %v73
    %v238 = vunpack.c.h.b16 %v73
    %v239 = vunpack.c.l.b16 %v74
    %v240 = vunpack.c.h.b16 %v74
    %v241 = vunpack.c.l.b16 %v75
    %v242 = vunpack.c.h.b16 %v75
    %v243 = vunpack.c.l.b16 %v76
    %v244 = vunpack.c.h.b16 %v76
    %v245 = vunpack.c.l.b16 %v77
    %v246 = vunpack.c.h.b16 %v77
    %v247 = vunpack.c.l.b16 %v78
    %v248 = vunpack.c.h.b16 %v78
    %v249 = vunpack.c.l.b16 %v79
    %v250 = vunpack.c.h.b16 %v79
    %v251 = vunpack.c.l.b16 %v80
    %v252 = vunpack.c.h.b16 %v80
    %v253 = vunpack.c.l.b16 %v81
    %v254 = vunpack.c.h.b16 %v81
    %v255 = vunpack.c.l.b16 %v82
    %v256 = vunpack.c.h.b16 %v82
    %v257 = vunpack.c.l.b16 %v83
    %v258 = vunpack.c.h.b16 %v83
    %v259 = vunpack.c.l.b16 %v84
    %v260 = vunpack.c.h.b16 %v84
    %v261 = vunpack.c.l.b16 %v85
    %v262 = vunpack.c.h.b16 %v85
    %v263 = vunpack.c.l.b16 %v86
    %v264 = vunpack.c.h.b16 %v86
    %v265 = vunpack.c.l.b16 %v87
    %v266 = vunpack.c.h.b16 %v87
    %v267 = vunpack.c.l.b16 %v88
    %v268 = vunpack.c.h.b16 %v88
    %v269 = vunpack.c.l.b16 %v89
    %v270 = vunpack.c.h.b16 %v89
    %v271 = vunpack.c.l.b16 %v90
    %v272 = vunpack.c.h.b16 %v90
    %v273 = vunpack.c.l.b16 %v91
    %v274 = vunpack.c.h.b16 %v91
    %v275 = vunpack.c.l.b16 %v92
    %v276 = vunpack.c.h.b16 %v92
    %v277 = vunpack.c.l.b16 %v93
    %v278 = vunpack.c.h.b16 %v93
    %v279 = vunpack.c.l.b16 %v94
    %v280 = vunpack.c.h.b16 %v94
    %v281 = vunpack.c.l.b16 %v95
    %v282 = vunpack.c.h.b16 %v95
    %v283 = vunpack.c.l.b16 %v96
    %v284 = vunpack.c.h.b16 %v96
    %v285 = vpack.c.b16 %v225, %v221
    %v286 = vpack.c.b16 %v226, %v222
    %v287 = vpack.c.b16 %v227, %v223
    %v288 = vpack.c.b16 %v228, %v224
    %v289 = vpack.c.b16 %v233, %v229
    %v290 = vpack.c.b16 %v234, %v230
    %v291 = vpack.c.b16 %v235, %v231
    %v292 = vpack.c.b16 %v236, %v232
    %v293 = vpack.c.b16 %v241, %v237
    %v294 = vpack.c.b16 %v242, %v238
    %v295 = vpack.c.b16 %v243, %v239
    %v296 = vpack.c.b16 %v244, %v240
    %v297 = vpack.c.b16 %v249, %v245
    %v298 = vpack.c.b16 %v250, %v246
    %v299 = vpack.c.b16 %v251, %v247
    %v300 = vpack.c.b16 %v252, %v248
    %v301 = vpack.c.b16 %v257, %v253
    %v302 = vpack.c.b16 %v258, %v254
    %v303 = vpack.c.b16 %v259, %v255
    %v304 = vpack.c.b16 %v260, %v256
    %v305 = vpack.c.b16 %v265, %v261
    %v306 = vpack.c.b16 %v266, %v262
    %v307 = vpack.c.b16 %v267, %v263
    %v308 = vpack.c.b16 %v268, %v264
    %v309 = vpack.c.b16 %v273, %v269
    %v310 = vpack.c.b16 %v274, %v270
    %v311 = vpack.c.b16 %v275, %v271
    %v312 = vpack.c.b16 %v276, %v272
    %v313 = vpack.c.b16 %v281, %v277
    %v314 = vpack.c.b16 %v282, %v278
    %v315 = vpack.c.b16 %v283, %v279
    %v316 = vpack.c.b16 %v284, %v280
    %349 = vmatprep.subr.bf16.mxu0 %v286
    %350 = vmatpush1.bf16.msra.mxu0 %v285
    %351 = vmatprep.subr.bf16.mxu0 %v290
    %352 = vmatpush1.bf16.msra.mxu0 %v289
    %353 = vmatprep.subr.bf16.mxu0 %v294
    %354 = vmatpush1.bf16.msra.mxu0 %v293
    %355 = vmatprep.subr.bf16.mxu0 %v298
    %356 = vmatpush1.bf16.msra.mxu0 %v297
    %357 = vmatprep.subr.bf16.mxu0 %v302
    %358 = vmatpush1.bf16.msra.mxu0 %v301
    %359 = vmatprep.subr.bf16.mxu0 %v306
    %360 = vmatpush1.bf16.msra.mxu0 %v305
    %361 = vmatprep.subr.bf16.mxu0 %v310
    %362 = vmatpush1.bf16.msra.mxu0 %v309
    %363 = vmatprep.subr.bf16.mxu0 %v314
    %364 = vmatpush1.bf16.msra.mxu0 %v313
    %365 = vmatprep.subr.bf16.mxu0 0
    %366 = vmatpush1.bf16.msra.mxu0 0
    %367 = vmatprep.subr.bf16.mxu0 0
    %368 = vmatpush1.bf16.msra.mxu0 0
    %369 = vmatprep.subr.bf16.mxu0 0
    %370 = vmatpush1.bf16.msra.mxu0 0
    %371 = vmatprep.subr.bf16.mxu0 0
    %372 = vmatpush1.bf16.msra.mxu0 0
    %373 = vmatprep.subr.bf16.mxu0 0
    %374 = vmatpush1.bf16.msra.mxu0 0
    %375 = vmatprep.subr.bf16.mxu0 0
    %376 = vmatpush1.bf16.msra.mxu0 0
    %377 = vmatprep.subr.bf16.mxu0 0
    %378 = vmatpush1.bf16.msra.mxu0 0
    %379 = vmatprep.subr.bf16.mxu0 0
    %380 = vmatpush1.bf16.msra.mxu0 0
    %381 = vmatprep.mubr.bf16.mxu0 0
    %382 = vmatmul.mubr.bf16.gmra.mrb[0].mxu0 %v187
    %v383 = vpop.f32.mrb[0].mxu0
    %v384 = vadd.f32 %v166, %v383
    %v385 = vpop.f32.mrb[0].mxu0
    %v386 = vadd.f32 %v170, %v385
    %v387 = vpop.f32.mrb[0].mxu0
    %v388 = vadd.f32 %v166, %v387
    %v389 = vpop.f32.mrb[0].mxu0
    %v390 = vadd.f32 %v170, %v389
    %391 = vdwg.mxu0
    %392 = vmatprep.subr.bf16.mxu0 %v288
    %393 = vmatpush1.bf16.msra.mxu0 %v287
    %394 = vmatprep.subr.bf16.mxu0 %v292
    %395 = vmatpush1.bf16.msra.mxu0 %v291
    %396 = vmatprep.subr.bf16.mxu0 %v296
    %397 = vmatpush1.bf16.msra.mxu0 %v295
    %398 = vmatprep.subr.bf16.mxu0 %v300
    %399 = vmatpush1.bf16.msra.mxu0 %v299
    %400 = vmatprep.subr.bf16.mxu0 %v304
    %401 = vmatpush1.bf16.msra.mxu0 %v303
    %402 = vmatprep.subr.bf16.mxu0 %v308
    %403 = vmatpush1.bf16.msra.mxu0 %v307
    %404 = vmatprep.subr.bf16.mxu0 %v312
    %405 = vmatpush1.bf16.msra.mxu0 %v311
    %406 = vmatprep.subr.bf16.mxu0 %v316
    %407 = vmatpush1.bf16.msra.mxu0 %v315
    %408 = vmatprep.subr.bf16.mxu0 0
    %409 = vmatpush1.bf16.msra.mxu0 0
    %410 = vmatprep.subr.bf16.mxu0 0
    %411 = vmatpush1.bf16.msra.mxu0 0
    %412 = vmatprep.subr.bf16.mxu0 0
    %413 = vmatpush1.bf16.msra.mxu0 0
    %414 = vmatprep.subr.bf16.mxu0 0
    %415 = vmatpush1.bf16.msra.mxu0 0
    %416 = vmatprep.subr.bf16.mxu0 0
    %417 = vmatpush1.bf16.msra.mxu0 0
    %418 = vmatprep.subr.bf16.mxu0 0
    %419 = vmatpush1.bf16.msra.mxu0 0
    %420 = vmatprep.subr.bf16.mxu0 0
    %421 = vmatpush1.bf16.msra.mxu0 0
    %422 = vmatprep.subr.bf16.mxu0 0
    %423 = vmatpush1.bf16.msra.mxu0 0
    %424 = vmatprep.mubr.bf16.mxu0 0
    %425 = vmatmul.mubr.bf16.gmra.mrb[0].mxu0 %v187
    %v426 = vpop.f32.mrb[0].mxu0
    %v427 = vadd.f32 %v174, %v426
    %v428 = vpop.f32.mrb[0].mxu0
    %v429 = vadd.f32 %v178, %v428
    %v430 = vpop.f32.mrb[0].mxu0
    %v431 = vadd.f32 %v174, %v430
    %v432 = vpop.f32.mrb[0].mxu0
    %v433 = vadd.f32 %v178, %v432
    %434 = vdwg.mxu0
    %v435 = vmul.f32 %v384, 0.5
    %v436 = vmul.f32 %v386, 0.5
    %v437 = vmul.f32 %v427, 0.5
    %v438 = vmul.f32 %v429, 0.5
    %v439 = vmul.f32 %v388, 0.5
    %v440 = vmul.f32 %v390, 0.5
    %v441 = vmul.f32 %v431, 0.5
    %v442 = vmul.f32 %v433, 0.5
    %v443 = vmul.f32 %v384, %v384
    %v444 = vmul.f32 %v386, %v386
    %v445 = vmul.f32 %v427, %v427
    %v446 = vmul.f32 %v429, %v429
    %v447 = vmul.f32 %v388, %v388
    %v448 = vmul.f32 %v390, %v390
    %v449 = vmul.f32 %v431, %v431
    %v450 = vmul.f32 %v433, %v433
    %v451 = vmul.f32 %v443, 0.035677407
    %v452 = vmul.f32 %v444, 0.035677407
    %v453 = vmul.f32 %v445, 0.035677407
    %v454 = vmul.f32 %v446, 0.035677407
    %v455 = vmul.f32 %v447, 0.035677407
    %v456 = vmul.f32 %v448, 0.035677407
    %v457 = vmul.f32 %v449, 0.035677407
    %v458 = vmul.f32 %v450, 0.035677407
    %v459 = vadd.f32 %v451, 0.7978846
    %v460 = vadd.f32 %v452, 0.7978846
    %v461 = vadd.f32 %v453, 0.7978846
    %v462 = vadd.f32 %v454, 0.7978846
    %v463 = vadd.f32 %v455, 0.7978846
    %v464 = vadd.f32 %v456, 0.7978846
    %v465 = vadd.f32 %v457, 0.7978846
    %v466 = vadd.f32 %v458, 0.7978846
    %v467 = vmul.f32 %v384, %v459
    %v468 = vmul.f32 %v386, %v460
    %v469 = vmul.f32 %v427, %v461
    %v470 = vmul.f32 %v429, %v462
    %v471 = vmul.f32 %v388, %v463
    %v472 = vmul.f32 %v390, %v464
    %v473 = vmul.f32 %v431, %v465
    %v474 = vmul.f32 %v433, %v466
    %v475 = vtanh.pop %v467
    %v476 = vtanh.pop %v468
    %v477 = vtanh.pop %v469
    %v478 = vtanh.pop %v470
    %v479 = vtanh.pop %v471
    %v480 = vtanh.pop %v472
    %v481 = vtanh.pop %v473
    %v482 = vtanh.pop %v474
    %v483 = vadd.f32 %v475, 1.0
    %v484 = vadd.f32 %v476, 1.0
    %v485 = vadd.f32 %v477, 1.0
    %v486 = vadd.f32 %v478, 1.0
    %v487 = vadd.f32 %v479, 1.0
    %v488 = vadd.f32 %v480, 1.0
    %v489 = vadd.f32 %v481, 1.0
    %v490 = vadd.f32 %v482, 1.0
    %v491 = vmul.f32 %v435, %v483
    %v492 = vmul.f32 %v436, %v484
    %v493 = vmul.f32 %v437, %v485
    %v494 = vmul.f32 %v438, %v486
    %v495 = vmul.f32 %v439, %v487
    %v496 = vmul.f32 %v440, %v488
    %v497 = vmul.f32 %v441, %v489
    %v498 = vmul.f32 %v442, %v490
    %v499 = vpack.c.bf16 %v495, %v491
    %v500 = vpack.c.bf16 %v496, %v492
    %v501 = vpack.c.bf16 %v497, %v493
    %v502 = vpack.c.bf16 %v498, %v494
    %v503 = vld [vmem:[%s4] sm:$0x1]
    %v505 = vlaneseq
    %v506 = vshrl.u32 %v505, 7
    %v507 = vsub.s32 0, %v506
    %v508 = vrot.slane %v503, %v507
    %v574 = vunpack.c.l.b16 %v98
    %v575 = vunpack.c.l.b16 %v99
    %v576 = vunpack.c.l.b16 %v100
    %v577 = vunpack.c.l.b16 %v101
    %v578 = vunpack.c.l.b16 %v102
    %v579 = vunpack.c.l.b16 %v103
    %v580 = vunpack.c.l.b16 %v104
    %v581 = vunpack.c.l.b16 %v105
    %v582 = vunpack.c.l.b16 %v106
    %v583 = vunpack.c.l.b16 %v107
    %v584 = vunpack.c.l.b16 %v108
    %v585 = vunpack.c.l.b16 %v109
    %v586 = vunpack.c.l.b16 %v110
    %v587 = vunpack.c.l.b16 %v111
    %v588 = vunpack.c.l.b16 %v112
    %v589 = vunpack.c.l.b16 %v113
    %v590 = vunpack.c.l.b16 %v114
    %v591 = vunpack.c.l.b16 %v115
    %v592 = vunpack.c.l.b16 %v116
    %v593 = vunpack.c.l.b16 %v117
    %v594 = vunpack.c.l.b16 %v118
    %v595 = vunpack.c.l.b16 %v119
    %v596 = vunpack.c.l.b16 %v120
    %v597 = vunpack.c.l.b16 %v121
    %v598 = vunpack.c.l.b16 %v122
    %v599 = vunpack.c.l.b16 %v123
    %v600 = vunpack.c.l.b16 %v124
    %v601 = vunpack.c.l.b16 %v125
    %v602 = vunpack.c.l.b16 %v126
    %v603 = vunpack.c.l.b16 %v127
    %v604 = vunpack.c.l.b16 %v128
    %v605 = vunpack.c.l.b16 %v129
    %v606 = vunpack.c.l.b16 %v130
    %v607 = vunpack.c.l.b16 %v131
    %v608 = vunpack.c.l.b16 %v132
    %v609 = vunpack.c.l.b16 %v133
    %v610 = vunpack.c.l.b16 %v134
    %v611 = vunpack.c.l.b16 %v135
    %v612 = vunpack.c.l.b16 %v136
    %v613 = vunpack.c.l.b16 %v137
    %v614 = vunpack.c.l.b16 %v138
    %v615 = vunpack.c.l.b16 %v139
    %v616 = vunpack.c.l.b16 %v140
    %v617 = vunpack.c.l.b16 %v141
    %v618 = vunpack.c.l.b16 %v142
    %v619 = vunpack.c.l.b16 %v143
    %v620 = vunpack.c.l.b16 %v144
    %v621 = vunpack.c.l.b16 %v145
    %v622 = vunpack.c.l.b16 %v146
    %v623 = vunpack.c.l.b16 %v147
    %v624 = vunpack.c.l.b16 %v148
    %v625 = vunpack.c.l.b16 %v149
    %v626 = vunpack.c.l.b16 %v150
    %v627 = vunpack.c.l.b16 %v151
    %v628 = vunpack.c.l.b16 %v152
    %v629 = vunpack.c.l.b16 %v153
    %v630 = vunpack.c.l.b16 %v154
    %v631 = vunpack.c.l.b16 %v155
    %v632 = vunpack.c.l.b16 %v156
    %v633 = vunpack.c.l.b16 %v157
    %v634 = vunpack.c.l.b16 %v158
    %v635 = vunpack.c.l.b16 %v159
    %v636 = vunpack.c.l.b16 %v160
    %v637 = vunpack.c.l.b16 %v161
    %v638 = vpack.c.b16 %v575, %v574
    %v639 = vpack.c.b16 %v577, %v576
    %v640 = vpack.c.b16 %v579, %v578
    %v641 = vpack.c.b16 %v581, %v580
    %v642 = vpack.c.b16 %v583, %v582
    %v643 = vpack.c.b16 %v585, %v584
    %v644 = vpack.c.b16 %v587, %v586
    %v645 = vpack.c.b16 %v589, %v588
    %v646 = vpack.c.b16 %v591, %v590
    %v647 = vpack.c.b16 %v593, %v592
    %v648 = vpack.c.b16 %v595, %v594
    %v649 = vpack.c.b16 %v597, %v596
    %v650 = vpack.c.b16 %v599, %v598
    %v651 = vpack.c.b16 %v601, %v600
    %v652 = vpack.c.b16 %v603, %v602
    %v653 = vpack.c.b16 %v605, %v604
    %v654 = vpack.c.b16 %v607, %v606
    %v655 = vpack.c.b16 %v609, %v608
    %v656 = vpack.c.b16 %v611, %v610
    %v657 = vpack.c.b16 %v613, %v612
    %v658 = vpack.c.b16 %v615, %v614
    %v659 = vpack.c.b16 %v617, %v616
    %v660 = vpack.c.b16 %v619, %v618
    %v661 = vpack.c.b16 %v621, %v620
    %v662 = vpack.c.b16 %v623, %v622
    %v663 = vpack.c.b16 %v625, %v624
    %v664 = vpack.c.b16 %v627, %v626
    %v665 = vpack.c.b16 %v629, %v628
    %v666 = vpack.c.b16 %v631, %v630
    %v667 = vpack.c.b16 %v633, %v632
    %v668 = vpack.c.b16 %v635, %v634
    %v669 = vpack.c.b16 %v637, %v636
    %702 = vmatprep.subr.bf16.mxu0 0
    %703 = vmatpush1.bf16.msra.mxu0 %v638
    %704 = vmatprep.subr.bf16.mxu0 0
    %705 = vmatpush1.bf16.msra.mxu0 %v639
    %706 = vmatprep.subr.bf16.mxu0 0
    %707 = vmatpush1.bf16.msra.mxu0 %v640
    %708 = vmatprep.subr.bf16.mxu0 0
    %709 = vmatpush1.bf16.msra.mxu0 %v641
    %710 = vmatprep.subr.bf16.mxu0 0
    %711 = vmatpush1.bf16.msra.mxu0 %v642
    %712 = vmatprep.subr.bf16.mxu0 0
    %713 = vmatpush1.bf16.msra.mxu0 %v643
    %714 = vmatprep.subr.bf16.mxu0 0
    %715 = vmatpush1.bf16.msra.mxu0 %v644
    %716 = vmatprep.subr.bf16.mxu0 0
    %717 = vmatpush1.bf16.msra.mxu0 %v645
    %718 = vmatprep.subr.bf16.mxu0 0
    %719 = vmatpush1.bf16.msra.mxu0 %v646
    %720 = vmatprep.subr.bf16.mxu0 0
    %721 = vmatpush1.bf16.msra.mxu0 %v647
    %722 = vmatprep.subr.bf16.mxu0 0
    %723 = vmatpush1.bf16.msra.mxu0 %v648
    %724 = vmatprep.subr.bf16.mxu0 0
    %725 = vmatpush1.bf16.msra.mxu0 %v649
    %726 = vmatprep.subr.bf16.mxu0 0
    %727 = vmatpush1.bf16.msra.mxu0 %v650
    %728 = vmatprep.subr.bf16.mxu0 0
    %729 = vmatpush1.bf16.msra.mxu0 %v651
    %730 = vmatprep.subr.bf16.mxu0 0
    %731 = vmatpush1.bf16.msra.mxu0 %v652
    %732 = vmatprep.subr.bf16.mxu0 0
    %733 = vmatpush1.bf16.msra.mxu0 %v653
    %734 = vmatprep.mubr.bf16.mxu0 %v500
    %735 = vmatmul.mubr.bf16.gmra.mrb[0].mxu0 %v499
    %v736 = vpop.f32.mrb[0].mxu0
    %v737 = vadd.f32 %v508, %v736
    %v738 = vpop.f32.mrb[0].mxu0
    %v739 = vpop.f32.mrb[0].mxu0
    %v740 = vadd.f32 %v508, %v739
    %v741 = vpop.f32.mrb[0].mxu0
    %742 = vdwg.mxu0
    %743 = vmatprep.subr.bf16.mxu0 0
    %744 = vmatpush1.bf16.msra.mxu0 %v654
    %745 = vmatprep.subr.bf16.mxu0 0
    %746 = vmatpush1.bf16.msra.mxu0 %v655
    %747 = vmatprep.subr.bf16.mxu0 0
    %748 = vmatpush1.bf16.msra.mxu0 %v656
    %749 = vmatprep.subr.bf16.mxu0 0
    %750 = vmatpush1.bf16.msra.mxu0 %v657
    %751 = vmatprep.subr.bf16.mxu0 0
    %752 = vmatpush1.bf16.msra.mxu0 %v658
    %753 = vmatprep.subr.bf16.mxu0 0
    %754 = vmatpush1.bf16.msra.mxu0 %v659
    %755 = vmatprep.subr.bf16.mxu0 0
    %756 = vmatpush1.bf16.msra.mxu0 %v660
    %757 = vmatprep.subr.bf16.mxu0 0
    %758 = vmatpush1.bf16.msra.mxu0 %v661
    %759 = vmatprep.subr.bf16.mxu0 0
    %760 = vmatpush1.bf16.msra.mxu0 %v662
    %761 = vmatprep.subr.bf16.mxu0 0
    %762 = vmatpush1.bf16.msra.mxu0 %v663
    %763 = vmatprep.subr.bf16.mxu0 0
    %764 = vmatpush1.bf16.msra.mxu0 %v664
    %765 = vmatprep.subr.bf16.mxu0 0
    %766 = vmatpush1.bf16.msra.mxu0 %v665
    %767 = vmatprep.subr.bf16.mxu0 0
    %768 = vmatpush1.bf16.msra.mxu0 %v666
    %769 = vmatprep.subr.bf16.mxu0 0
    %770 = vmatpush1.bf16.msra.mxu0 %v667
    %771 = vmatprep.subr.bf16.mxu0 0
    %772 = vmatpush1.bf16.msra.mxu0 %v668
    %773 = vmatprep.subr.bf16.mxu0 0
    %774 = vmatpush1.bf16.msra.mxu0 %v669
    %775 = vmatprep.mubr.bf16.mxu0 %v502
    %776 = vmatmul.mubr.bf16.gmra.mrb[0].mxu0 %v501
    %v777 = vpop.f32.mrb[0].mxu0
    %v778 = vadd.f32 %v737, %v777
    %v779 = vpop.f32.mrb[0].mxu0
    %v780 = vpop.f32.mrb[0].mxu0
    %v781 = vadd.f32 %v740, %v780
    %v782 = vpop.f32.mrb[0].mxu0
    %783 = vdwg.mxu0
    %784 = vst [vmem:[#allocation8] sm:$0xff] %v778
    %785 = vst [vmem:[#allocation8 + $0x8] sm:$0xff] %v781
    // Predicated region
    $region34: #{tpu_custom_call.1} parent=1 // pred_check
      _
    $region35: #{tpu_custom_call.1} parent=1 // pred_check_branch
      %787 = sbr.rel (0) target = $region37
    $region36: #{tpu_custom_call.1} parent=1 // pred_region
      %s789 = ssub.s32 256, 256
      %790 = vsyncadd [#allocation4], %s789
      %s791 = sshll.u32 [#allocation8], 4
      %s792 = int_to_ptr.vmem [resolvable:$true] %s791
      %797 = dma.vmem_to_hbm [thread:$0]  %s792, 256, %s5, [#allocation4], 128, 128, 8
    $region37: #{tpu_custom_call.1} parent=1 // pred_fallthru
      _
    // Predicated region
    $region38: #{tpu_custom_call.1} parent=1 // pred_check
      _
    $region39: #{tpu_custom_call.1} parent=1 // pred_check_branch
      %799 = sbr.rel (0) target = $region41
    $region40: #{tpu_custom_call.1} parent=1 // pred_region
      %800 = dma.done [#allocation4], 256
    $region41: #{tpu_custom_call.1} parent=1 // pred_fallthru
      _
    %801 = vsyncpa [#allocation3], 1
    %802 = vsyncpa [#allocation6], 1
    %803 = vsyncpa [#allocation4], 1

</llo_original>
